<compile_context>
chip_gen: v6e
topology: v6e:2x2x1
jax: 0.10.0
libtpu: 0.0.40
codegen_flags: <defaults>
</compile_context>

<pallas_src>
import functools
import math

import jax
import jax.numpy as jnp
from jax.experimental import pallas as pl
from jax.experimental.pallas import tpu as pltpu

_MIB = 1024 * 1024

_GEN_TILES = {            # (row tile tm, hidden/reduction tile tk)
    "v5e": (256, 512),     # ridge ~240 flop/B -> already compute-bound here
    "v6e": (1024, 512),    # ridge ~675 flop/B -> big row tiles / resident weights
    "v7x": (512, 512),     # ridge ~310 flop/B, but only 64 MiB VMEM per core
    "unknown": (512, 512),
}


def _round_up(x, n):
    return ((x + n - 1) // n) * n


@functools.lru_cache(maxsize=1)
def _chip_info():
    """Best-effort TPU generation string + physical VMEM size in bytes."""
    kind = ""
    try:
        kind = jax.devices()[0].device_kind.lower()
    except Exception:
        pass
    vmem_phys = None
    try:
        vmem_phys = int(getattr(pltpu.get_tpu_info(), "vmem_capacity_bytes", 0)) or None
    except Exception:
        vmem_phys = None
    if "v7" in kind or "7x" in kind:
        gen = "v7x"
    elif "v6" in kind:
        gen = "v6e"
    elif "v5" in kind:
        gen = "v5e"
    else:
        gen = "unknown"
    if vmem_phys is None:
        # v7x: 64 MiB per TensorCore; v5e/v6e: 128 MiB. Unknown -> conservative.
        vmem_phys = 64 * _MIB if gen in ("v7x", "unknown") else 128 * _MIB
    return gen, vmem_phys


def _pick_config(m, dim_ff, x_sz, c_sz, o_sz):
    """Choose (tm, tk, weight buffer count) per generation and VMEM budget."""
    gen, vmem_phys = _chip_info()
    tm0, tk0 = _GEN_TILES.get(gen, _GEN_TILES["unknown"])
    # Soft VMEM cap: physical minus headroom (bigger headroom on 128 MiB parts,
    # tighter but still safe margin on v7x's 64 MiB).
    cap = vmem_phys - (24 * _MIB if vmem_phys >= 128 * _MIB else 12 * _MIB)
    margin = 8 * _MIB  # Mosaic internal scratch / layout slack

    # Row-tile candidates (multiples of 8, >= 128). Keep >= 2 row tiles when m
    # allows so the "parallel" M axis can be sharded across v7x TensorCores.
    tm_max = max(128, min(tm0, _round_up(m, 128)))
    while tm_max > 128 and pl.cdiv(m, tm_max) < 2:
        tm_max //= 2
    tm_max = max(128, tm_max)
    tm_cands = []
    t = tm_max
    while t >= 128:
        tm_cands.append(t)
        t //= 2
    if tm_cands[-1] != 128:
        tm_cands.append(128)

    def vmem_est(tm, tk, wbuf):
        return (2 * tm * dim_ff * x_sz          # x tile (double-buffered, input dtype)
                + wbuf * dim_ff * tk * c_sz     # W1 tile(s)
                + wbuf * tk * dim_ff * c_sz     # W2 tile(s)
                + 2 * (tk + dim_ff) * 4         # b1 / b2 tiles (f32)
                + 2 * tm * dim_ff * o_sz        # out tile (double-buffered)
                + tm * dim_ff * 4               # f32 accumulator / result
                + tm * dim_ff * c_sz            # in-kernel cast copy of x
                + tm * tk * 4                   # h intermediate (f32)
                + tm * tk * c_sz)               # h cast to compute dtype

    # 1) Weights fully VMEM-resident (tk == dim_ff, constant index_map). Prefer
    #    default double buffering; fall back to single-buffered weights
    #    (pl.Buffered(1)) only when that is what makes residency fit.
    for wbuf in (2, 1):
        for tm in tm_cands:
            est = vmem_est(tm, dim_ff, wbuf)
            if est + margin <= cap:
                return dict(tm=tm, tk=dim_ff, weight_bufs=wbuf, cap=cap,
                            est=est, vmem_phys=vmem_phys)

    # 2) Stream weights along the hidden axis: tk = largest multiple of 128 that
    #    divides dim_ff (never the full matrix unless dim_ff has no such divisor).
    tk_cands = [t for t in range(128, min(tk0, dim_ff) + 1, 128) if dim_ff % t == 0]
    tk_cands = sorted(tk_cands, reverse=True) or [dim_ff]
    for tm in tm_cands:            # tm is the flops/weight-byte (intensity) knob
        for tk in tk_cands:
            est = vmem_est(tm, tk, 2)
            if est + margin <= cap:
                return dict(tm=tm, tk=tk, weight_bufs=2, cap=cap,
                            est=est, vmem_phys=vmem_phys)

    # 3) Last resort: smallest tiles; may exceed the soft cap, let Mosaic decide.
    # TODO(synk): dim_ff with no multiple-of-128 divisor degenerates to full-width
    # weight tiles and can still VMEM-OOM for very large dim_ff.
    tm, tk = 128, tk_cands[-1]
    return dict(tm=tm, tk=tk, weight_bufs=2, cap=cap,
                est=vmem_est(tm, tk, 2), vmem_phys=vmem_phys)


# ----------------------------- kernels ---------------------------------------

def _ffn_kernel_resident(x_ref, w1_ref, b1_ref, w2_ref, b2_ref, o_ref):
    """Whole hidden dim resident: one fused pass, no accumulator round-trip."""
    xb = x_ref[...].astype(w1_ref.dtype)                       # cast on the tile
    h = jnp.dot(xb, w1_ref[...], preferred_element_type=jnp.float32)
    h = jnp.maximum(h + b1_ref[...], 0.0)
    y = jnp.dot(h.astype(w2_ref.dtype), w2_ref[...],
                preferred_element_type=jnp.float32)
    o_ref[...] = (y + b2_ref[...]).astype(o_ref.dtype)


def _ffn_kernel_ktiled(x_ref, w1_ref, b1_ref, w2_ref, b2_ref, o_ref, acc_ref):
    k = pl.program_id(1)

    xb = x_ref[...].astype(w1_ref.dtype)                       # cast on the tile
    # h_k = relu(x @ W1[:, k-tile] + b1[k-tile])               (f32 accumulation)
    h = jnp.dot(xb, w1_ref[...], preferred_element_type=jnp.float32)
    h = jnp.maximum(h + b1_ref[...], 0.0)
    # partial = h_k @ W2[k-tile, :]                            (f32 accumulation)
    contrib = jnp.dot(h.astype(w2_ref.dtype), w2_ref[...],
                      preferred_element_type=jnp.float32)

    # First k step writes the accumulator directly (no zero-fill pass).
    @pl.when(k == 0)
    def _():
        acc_ref[...] = contrib

    @pl.when(k != 0)
    def _():
        acc_ref[...] += contrib

    # Finalize (bias-2 add + store) only on the last reduction step.
    @pl.when(k == pl.num_programs(1) - 1)
    def _():
        o_ref[...] = (acc_ref[...] + b2_ref[...]).astype(o_ref.dtype)


# ----------------------------- wrapper ----------------------------------------

@functools.partial(jax.jit, static_argnames=("compute_dtype",))
def feed_forward_block(x, w1, b1, w2, b2, *, compute_dtype=jnp.bfloat16):
    """x: (batch, seq, dim_ff); w*: (dim_ff, dim_ff) = torch weight.T; b*: (dim_ff,)."""
    batch, seq, dim_ff = x.shape
    m = batch * seq
    out_dtype = x.dtype

    x_sz = jnp.dtype(x.dtype).itemsize
    c_sz = jnp.dtype(compute_dtype).itemsize
    o_sz = jnp.dtype(out_dtype).itemsize

    cfg = _pick_config(m, dim_ff, x_sz, c_sz, o_sz)
    tm, tk, wbuf = cfg["tm"], cfg["tk"], cfg["weight_bufs"]
    cap, est, vmem_phys = cfg["cap"], cfg["est"], cfg["vmem_phys"]

    grid_m = pl.cdiv(m, tm)
    grid_k = max(1, dim_ff // tk)
    m_pad = grid_m * tm

    # No HBM-side cast of x (the cast happens on the VMEM tile inside the
    # kernel); pad rows only when the row count is ragged w.r.t. the row tile.
    x2d = x.reshape(m, dim_ff)
    if m_pad != m:
        x2d = jnp.pad(x2d, ((0, m_pad - m), (0, 0)))
    w1c = w1.astype(compute_dtype)
    w2c = w2.astype(compute_dtype)
    b1_2d = b1.reshape(1, dim_ff).astype(jnp.float32)
    b2_2d = b2.reshape(1, dim_ff).astype(jnp.float32)

    # VMEM limit: estimate * safety, capped at physical-minus-headroom. Only the
    # degenerate fallback is allowed to push toward the full physical VMEM.
    soft_cap = cap
    if est + 8 * _MIB > cap:
        soft_cap = max(cap, min(vmem_phys - 2 * _MIB, int(est * 1.2) + 8 * _MIB))
    vmem_limit = int(min(soft_cap, max(int(est * 1.75) + 8 * _MIB, 32 * _MIB)))

    weight_passes = 1 if tk == dim_ff else grid_m   # resident vs streamed
    cost = pl.CostEstimate(
        flops=4 * m * dim_ff * dim_ff,               # two matmuls, 2*M*D*D each
        transcendentals=0,
        bytes_accessed=(m * dim_ff * x_sz                          # x
                        + weight_passes * 2 * dim_ff * dim_ff * c_sz  # W1, W2
                        + (grid_m + 1) * dim_ff * 4                # b1, b2
                        + m * dim_ff * o_sz))                      # out

    # Single-buffer resident weights only when that is what makes them fit.
    w_kwargs = {"pipeline_mode": pl.Buffered(1)} if wbuf == 1 else {}

    if grid_k == 1:
        # Weights resident across all row tiles (constant index_map -> one DMA).
        grid_spec = pltpu.PrefetchScalarGridSpec(
            num_scalar_prefetch=0,
            grid=(grid_m,),
            in_specs=[
                pl.BlockSpec((tm, dim_ff), lambda i: (i, 0)),                  # x rows
                pl.BlockSpec((dim_ff, dim_ff), lambda i: (0, 0), **w_kwargs),  # W1
                pl.BlockSpec((1, dim_ff), lambda i: (0, 0)),                   # b1
                pl.BlockSpec((dim_ff, dim_ff), lambda i: (0, 0), **w_kwargs),  # W2
                pl.BlockSpec((1, dim_ff), lambda i: (0, 0)),                   # b2
            ],
            out_specs=pl.BlockSpec((tm, dim_ff), lambda i: (i, 0)),
        )
        kernel = _ffn_kernel_resident
        dim_sem = ("parallel",)
    else:
        # Stream weight k-tiles; reduction axis last, f32 accumulator resident.
        grid_spec = pltpu.PrefetchScalarGridSpec(
            num_scalar_prefetch=0,
            grid=(grid_m, grid_k),
            in_specs=[
                pl.BlockSpec((tm, dim_ff), lambda i, k: (i, 0)),   # x rows (held over k)
                pl.BlockSpec((dim_ff, tk), lambda i, k: (0, k)),   # W1 col-tile
                pl.BlockSpec((1, tk), lambda i, k: (0, k)),        # b1 tile
                pl.BlockSpec((tk, dim_ff), lambda i, k: (k, 0)),   # W2 row-tile
                pl.BlockSpec((1, dim_ff), lambda i, k: (0, 0)),    # b2 (full)
            ],
            out_specs=pl.BlockSpec((tm, dim_ff), lambda i, k: (i, 0)),
            scratch_shapes=[pltpu.VMEM((tm, dim_ff), jnp.float32)],
        )
        kernel = _ffn_kernel_ktiled
        dim_sem = ("parallel", "arbitrary")

    out2d = pl.pallas_call(
        kernel,
        out_shape=jax.ShapeDtypeStruct((m_pad, dim_ff), out_dtype),
        grid_spec=grid_spec,
        compiler_params=pltpu.CompilerParams(
            dimension_semantics=dim_sem,
            vmem_limit_bytes=vmem_limit),
        cost_estimate=cost,
    )(x2d, w1c, b1_2d, w2c, b2_2d)

    if m_pad != m:
        out2d = out2d[:m]
    return out2d.reshape(batch, seq, dim_ff)


def init_params(key, dim_ff, dtype=jnp.float32):
    """Deterministic init mimicking nn.Linear's U(-1/sqrt(fan_in), 1/sqrt(fan_in))."""
    k1, k2, k3, k4 = jax.random.split(key, 4)
    bound = 1.0 / math.sqrt(dim_ff)
    # stored as (in_features, out_features) == PyTorch weight.T
    w1 = jax.random.uniform(k1, (dim_ff, dim_ff), dtype, -bound, bound)
    b1 = jax.random.uniform(k2, (dim_ff,), dtype, -bound, bound)
    w2 = jax.random.uniform(k3, (dim_ff, dim_ff), dtype, -bound, bound)
    b2 = jax.random.uniform(k4, (dim_ff,), dtype, -bound, bound)
    return w1, b1, w2, b2


if __name__ == "__main__":
    key = jax.random.PRNGKey(0)
    batch, seq, dim_ff = 2, 8, 128  # small demo; kernel scales to large M/dim_ff

    k_x, k_p = jax.random.split(key)
    x = jax.random.normal(k_x, (batch, seq, dim_ff), jnp.float32)
    w1, b1, w2, b2 = init_params(k_p, dim_ff)

    # pure-JAX f32 reference
    ref = jnp.maximum(x @ w1 + b1, 0.0) @ w2 + b2

    # Default mixed-precision path (bf16 matmuls, f32 accumulate) — loose tol.
    out = feed_forward_block(x, w1, b1, w2, b2)
    out = jax.block_until_ready(out)
    assert out.shape == (batch, seq, dim_ff)
    assert jnp.allclose(out, ref, atol=5e-2, rtol=5e-2)

    # Full f32 path — tight tolerance against the reference.
    out_f32 = feed_forward_block(x, w1, b1, w2, b2, compute_dtype=jnp.float32)
    out_f32 = jax.block_until_ready(out_f32)
    assert jnp.allclose(out_f32, ref, atol=1e-5, rtol=1e-5)

    print("KERNEL_OK")
</pallas_src>

<mosaic_0001>
module attributes {stable_mosaic.version = 11 : i64} {
  func.func @_ffn_kernel_resident(%arg0: i32, %arg1: memref<128x128xf32, #tpu.memory_space<vmem>>, %arg2: memref<128x128xbf16, #tpu.memory_space<vmem>>, %arg3: memref<1x128xf32, #tpu.memory_space<vmem>>, %arg4: memref<128x128xbf16, #tpu.memory_space<vmem>>, %arg5: memref<1x128xf32, #tpu.memory_space<vmem>>, %arg6: memref<128x128xf32, #tpu.memory_space<vmem>>) attributes {dimension_semantics = [#tpu.dimension_semantics<parallel>], iteration_bounds = array<i64: 1>, scalar_prefetch = 0 : i64, scratch_operands = 0 : i64, tpu.core_type = #tpu.core_type<tc>, window_params = [{transform_indices = @transform_0, window_bounds = array<i64: 128, 128>}, {pipeline_mode = #tpu.pipeline_mode<synchronous>, transform_indices = @transform_1, window_bounds = array<i64: 128, 128>}, {pipeline_mode = #tpu.pipeline_mode<synchronous>, transform_indices = @transform_2, window_bounds = array<i64: 1, 128>}, {pipeline_mode = #tpu.pipeline_mode<synchronous>, transform_indices = @transform_3, window_bounds = array<i64: 128, 128>}, {pipeline_mode = #tpu.pipeline_mode<synchronous>, transform_indices = @transform_4, window_bounds = array<i64: 1, 128>}, {transform_indices = @transform_5, window_bounds = array<i64: 128, 128>}]} {
    %c0 = arith.constant 0 : index
    %c0_0 = arith.constant 0 : index
    %0 = vector.load %arg1[%c0, %c0_0] : memref<128x128xf32, #tpu.memory_space<vmem>>, vector<128x128xf32>
    %1 = arith.truncf %0 : vector<128x128xf32> to vector<128x128xbf16>
    %c0_1 = arith.constant 0 : index
    %c0_2 = arith.constant 0 : index
    %2 = vector.load %arg2[%c0_1, %c0_2] : memref<128x128xbf16, #tpu.memory_space<vmem>>, vector<128x128xbf16>
    %cst = arith.constant dense<0.000000e+00> : vector<128x128xf32>
    %3 = tpu.matmul %1, %2, %cst {dimension_numbers = #tpu.dot_dimension_numbers<[1], [0], [0], [1], [0, 0, 1, 1], [], []>} : vector<128x128xbf16>, vector<128x128xbf16>, vector<128x128xf32> -> vector<128x128xf32>
    %c0_3 = arith.constant 0 : index
    %c0_4 = arith.constant 0 : index
    %4 = vector.load %arg3[%c0_3, %c0_4] : memref<1x128xf32, #tpu.memory_space<vmem>>, vector<1x128xf32>
    %5 = vector.broadcast %4 : vector<1x128xf32> to vector<128x128xf32>
    %6 = arith.addf %3, %5 : vector<128x128xf32>
    %cst_5 = arith.constant 0.000000e+00 : f32
    %7 = vector.broadcast %cst_5 : f32 to vector<128x128xf32>
    %8 = arith.maximumf %6, %7 : vector<128x128xf32>
    %9 = arith.truncf %8 : vector<128x128xf32> to vector<128x128xbf16>
    %c0_6 = arith.constant 0 : index
    %c0_7 = arith.constant 0 : index
    %10 = vector.load %arg4[%c0_6, %c0_7] : memref<128x128xbf16, #tpu.memory_space<vmem>>, vector<128x128xbf16>
    %cst_8 = arith.constant dense<0.000000e+00> : vector<128x128xf32>
    %11 = tpu.matmul %9, %10, %cst_8 {dimension_numbers = #tpu.dot_dimension_numbers<[1], [0], [0], [1], [0, 0, 1, 1], [], []>} : vector<128x128xbf16>, vector<128x128xbf16>, vector<128x128xf32> -> vector<128x128xf32>
    %c0_9 = arith.constant 0 : index
    %c0_10 = arith.constant 0 : index
    %12 = vector.load %arg5[%c0_9, %c0_10] : memref<1x128xf32, #tpu.memory_space<vmem>>, vector<1x128xf32>
    %13 = vector.broadcast %12 : vector<1x128xf32> to vector<128x128xf32>
    %14 = arith.addf %11, %13 : vector<128x128xf32>
    %c0_11 = arith.constant 0 : index
    %c0_12 = arith.constant 0 : index
    %15 = vector.load %arg6[%c0_11, %c0_12] : memref<128x128xf32, #tpu.memory_space<vmem>>, vector<128x128xf32>
    tpu.vector_store %arg6[%c0_11, %c0_12], %14 {strides = array<i32>} : memref<128x128xf32, #tpu.memory_space<vmem>>, vector<128x128xf32>,
    return
  }
  func.func @transform_0(%arg0: i32) -> (i32, i32) {
    %c0_i32 = arith.constant 0 : i32
    %c0_i32_0 = arith.constant 0 : i32
    return %arg0, %c0_i32 : i32, i32
  }
  func.func @transform_1(%arg0: i32) -> (i32, i32) {
    %c0_i32 = arith.constant 0 : i32
    %c0_i32_0 = arith.constant 0 : i32
    %c0_i32_1 = arith.constant 0 : i32
    return %c0_i32, %c0_i32_0 : i32, i32
  }
  func.func @transform_2(%arg0: i32) -> (i32, i32) {
    %c0_i32 = arith.constant 0 : i32
    %c0_i32_0 = arith.constant 0 : i32
    %c0_i32_1 = arith.constant 0 : i32
    return %c0_i32, %c0_i32_0 : i32, i32
  }
  func.func @transform_3(%arg0: i32) -> (i32, i32) {
    %c0_i32 = arith.constant 0 : i32
    %c0_i32_0 = arith.constant 0 : i32
    %c0_i32_1 = arith.constant 0 : i32
    return %c0_i32, %c0_i32_0 : i32, i32
  }
  func.func @transform_4(%arg0: i32) -> (i32, i32) {
    %c0_i32 = arith.constant 0 : i32
    %c0_i32_0 = arith.constant 0 : i32
    %c0_i32_1 = arith.constant 0 : i32
    return %c0_i32, %c0_i32_0 : i32, i32
  }
  func.func @transform_5(%arg0: i32) -> (i32, i32) {
    %c0_i32 = arith.constant 0 : i32
    %c0_i32_0 = arith.constant 0 : i32
    return %arg0, %c0_i32 : i32, i32
  }
}

</mosaic_0001>

<llo_original>
// kernel: feed_forward_block.1
$region0: #{feed_forward_block.1}
  #allocation0 [shape = 'u32[]', space=smem, size = 0x4, offset = 0x4, fixed_abs, tag = 'smem constant byte address 0x4 - core index']
  #allocation1 [shape = 'u32[144,128]{1,0:T(1,128)}', space=vmem, size = 0x12000, scoped, tag = 'internal scratch']
  %s0 = inlined_call_operand.vmem [shape: f32[128,128], index: 0, kind: input, shape index: {}]
  %s1 = inlined_call_operand.vmem [shape: bf16[128,128], index: 1, kind: input, shape index: {}]
  %s2 = inlined_call_operand.vmem [shape: f32[1,128], index: 2, kind: input, shape index: {}]
  %s3 = inlined_call_operand.vmem [shape: bf16[128,128], index: 3, kind: input, shape index: {}]
  %s4 = inlined_call_operand.vmem [shape: f32[1,128], index: 4, kind: input, shape index: {}]
  %s5 = inlined_call_operand.vmem [shape: f32[128,128], index: 5, kind: output, shape index: {}]
  %s6 = sld [smem:[#allocation0]]
  $region30: #{feed_forward_block.1} parent=0
    _
  %s8 = ssub.s32 1, %s6
  %s9 = scalar_select 0, %s8, %s6
  // Predicated region
  $region2: #{feed_forward_block.1} parent=0 // pred_check
    _
  $region3: #{feed_forward_block.1} parent=0 // pred_check_branch
    %11 = sbr.rel (0) target = $region5
  $region4: #{feed_forward_block.1} parent=0 // pred_region
    _
  $region5: #{feed_forward_block.1} parent=0 // pred_fallthru
    _
  // Predicated region
  $region6: #{feed_forward_block.1} parent=0 // pred_check
    _
  $region7: #{feed_forward_block.1} parent=0 // pred_check_branch
    %13 = sbr.rel (0) target = $region9
  $region8: #{feed_forward_block.1} parent=0 // pred_region
    _
  $region9: #{feed_forward_block.1} parent=0 // pred_fallthru
    _
  // Predicated region
  $region10: #{feed_forward_block.1} parent=0 // pred_check
    _
  $region11: #{feed_forward_block.1} parent=0 // pred_check_branch
    %15 = sbr.rel (0) target = $region13
  $region12: #{feed_forward_block.1} parent=0 // pred_region
    _
  $region13: #{feed_forward_block.1} parent=0 // pred_fallthru
    _
  // Predicated region
  $region14: #{feed_forward_block.1} parent=0 // pred_check
    _
  $region15: #{feed_forward_block.1} parent=0 // pred_check_branch
    %17 = sbr.rel (0) target = $region17
  $region16: #{feed_forward_block.1} parent=0 // pred_region
    _
  $region17: #{feed_forward_block.1} parent=0 // pred_fallthru
    _
  // Predicated region
  $region18: #{feed_forward_block.1} parent=0 // pred_check
    _
  $region19: #{feed_forward_block.1} parent=0 // pred_check_branch
    %19 = sbr.rel (0) target = $region21
  $region20: #{feed_forward_block.1} parent=0 // pred_region
    _
  $region21: #{feed_forward_block.1} parent=0 // pred_fallthru
    _
  %v21 = vld [vmem:[%s0] sm:$0xff]
  %v22 = vld [vmem:[%s0 + $0x8] sm:$0xff]
  %v23 = vld [vmem:[%s0 + $0x10] sm:$0xff]
  %v24 = vld [vmem:[%s0 + $0x18] sm:$0xff]
  %v25 = vld [vmem:[%s0 + $0x20] sm:$0xff]
  %v26 = vld [vmem:[%s0 + $0x28] sm:$0xff]
  %v27 = vld [vmem:[%s0 + $0x30] sm:$0xff]
  %v28 = vld [vmem:[%s0 + $0x38] sm:$0xff]
  %v29 = vld [vmem:[%s0 + $0x40] sm:$0xff]
  %v30 = vld [vmem:[%s0 + $0x48] sm:$0xff]
  %v31 = vld [vmem:[%s0 + $0x50] sm:$0xff]
  %v32 = vld [vmem:[%s0 + $0x58] sm:$0xff]
  %v33 = vld [vmem:[%s0 + $0x60] sm:$0xff]
  %v34 = vld [vmem:[%s0 + $0x68] sm:$0xff]
  %v35 = vld [vmem:[%s0 + $0x70] sm:$0xff]
  %v36 = vld [vmem:[%s0 + $0x78] sm:$0xff]
  %v37 = vpack.c.bf16 %v22, %v21
  %v38 = vpack.c.bf16 %v24, %v23
  %v39 = vpack.c.bf16 %v26, %v25
  %v40 = vpack.c.bf16 %v28, %v27
  %v41 = vpack.c.bf16 %v30, %v29
  %v42 = vpack.c.bf16 %v32, %v31
  %v43 = vpack.c.bf16 %v34, %v33
  %v44 = vpack.c.bf16 %v36, %v35
  %v45 = vld [vmem:[%s1] sm:$0xf]
  %v46 = vld [vmem:[%s1 + $0x4] sm:$0xf]
  %v47 = vld [vmem:[%s1 + $0x8] sm:$0xf]
  %v48 = vld [vmem:[%s1 + $0xc] sm:$0xf]
  %v49 = vld [vmem:[%s1 + $0x10] sm:$0xf]
  %v50 = vld [vmem:[%s1 + $0x14] sm:$0xf]
  %v51 = vld [vmem:[%s1 + $0x18] sm:$0xf]
  %v52 = vld [vmem:[%s1 + $0x1c] sm:$0xf]
  %v53 = vld [vmem:[%s1 + $0x20] sm:$0xf]
  %v54 = vld [vmem:[%s1 + $0x24] sm:$0xf]
  %v55 = vld [vmem:[%s1 + $0x28] sm:$0xf]
  %v56 = vld [vmem:[%s1 + $0x2c] sm:$0xf]
  %v57 = vld [vmem:[%s1 + $0x30] sm:$0xf]
  %v58 = vld [vmem:[%s1 + $0x34] sm:$0xf]
  %v59 = vld [vmem:[%s1 + $0x38] sm:$0xf]
  %v60 = vld [vmem:[%s1 + $0x3c] sm:$0xf]
  %v61 = vld [vmem:[%s2] sm:$0x1]
  %v63 = vlaneseq
  %v64 = vshrl.u32 %v63, 7
  %v65 = vsub.s32 0, %v64
  %v66 = vrot.slane %v61, %v65
  %v84 = vunpack.c.l.b16 %v45
  %v85 = vunpack.c.l.b16 %v46
  %v86 = vunpack.c.l.b16 %v47
  %v87 = vunpack.c.l.b16 %v48
  %v88 = vunpack.c.l.b16 %v49
  %v89 = vunpack.c.l.b16 %v50
  %v90 = vunpack.c.l.b16 %v51
  %v91 = vunpack.c.l.b16 %v52
  %v92 = vunpack.c.l.b16 %v53
  %v93 = vunpack.c.l.b16 %v54
  %v94 = vunpack.c.l.b16 %v55
  %v95 = vunpack.c.l.b16 %v56
  %v96 = vunpack.c.l.b16 %v57
  %v97 = vunpack.c.l.b16 %v58
  %v98 = vunpack.c.l.b16 %v59
  %v99 = vunpack.c.l.b16 %v60
  %v100 = vpack.c.b16 %v85, %v84
  %v101 = vpack.c.b16 %v87, %v86
  %v102 = vpack.c.b16 %v89, %v88
  %v103 = vpack.c.b16 %v91, %v90
  %v104 = vpack.c.b16 %v93, %v92
  %v105 = vpack.c.b16 %v95, %v94
  %v106 = vpack.c.b16 %v97, %v96
  %v107 = vpack.c.b16 %v99, %v98
  %116 = vmatprep.subr.bf16.mxu0 0
  %117 = vmatpush1.bf16.msra.mxu0 %v107
  %118 = vmatprep.subr.bf16.mxu0 0
  %119 = vmatpush1.bf16.msra.mxu0 %v106
  %120 = vmatprep.subr.bf16.mxu0 0
  %121 = vmatpush1.bf16.msra.mxu0 %v105
  %122 = vmatprep.subr.bf16.mxu0 0
  %123 = vmatpush1.bf16.msra.mxu0 %v104
  %124 = vmatprep.subr.bf16.mxu0 0
  %125 = vmatpush1.bf16.msra.mxu0 %v103
  %126 = vmatprep.subr.bf16.mxu0 0
  %127 = vmatpush1.bf16.msra.mxu0 %v102
  %128 = vmatprep.subr.bf16.mxu0 0
  %129 = vmatpush1.bf16.msra.mxu0 %v101
  %130 = vmatprep.subr.bf16.mxu0 0
  %131 = vmatpush1.bf16.msra.mxu0 %v100
  %132 = vmatprep.subr.bf16.mxu0 0
  %133 = vmatpush2.bf16.msra.mxu0 0
  %134 = vmatprep.subr.bf16.mxu0 0
  %135 = vmatpush2.bf16.msra.mxu0 0
  %136 = vmatprep.subr.bf16.mxu0 0
  %137 = vmatpush2.bf16.msra.mxu0 0
  %138 = vmatprep.subr.bf16.mxu0 0
  %139 = vmatpush2.bf16.msra.mxu0 0
  %140 = vmatprep.subr.bf16.mxu0 0
  %141 = vmatpush2.bf16.msra.mxu0 0
  %142 = vmatprep.subr.bf16.mxu0 0
  %143 = vmatpush2.bf16.msra.mxu0 0
  %144 = vmatprep.subr.bf16.mxu0 0
  %145 = vmatpush2.bf16.msra.mxu0 0
  %146 = vmatprep.subr.bf16.mxu0 0
  %147 = vmatpush2.bf16.msra.mxu0 0
  %148 = vmatprep.mubr.bf16.mxu0 0
  %149 = vmatmul.mubr.bf16.gmra.mxu0 %v37
  %v150 = vpop.f32.mrf.mxu0
  %v151 = vadd.f32 %v66, %v150
  %v152 = vpop.f32.mrf.mxu0
  %v153 = vpop.f32.mrf.mxu0
  %v154 = vadd.f32 %v66, %v153
  %v155 = vpop.f32.mrf.mxu0
  %156 = vmatprep.mubr.bf16.mxu0 0
  %157 = vmatmul.mubr.bf16.gmra.mxu0 %v38
  %v158 = vpop.f32.mrf.mxu0
  %v159 = vadd.f32 %v66, %v158
  %v160 = vpop.f32.mrf.mxu0
  %v161 = vpop.f32.mrf.mxu0
  %v162 = vadd.f32 %v66, %v161
  %v163 = vpop.f32.mrf.mxu0
  %164 = vmatprep.mubr.bf16.mxu0 0
  %165 = vmatmul.mubr.bf16.gmra.mxu0 %v39
  %v166 = vpop.f32.mrf.mxu0
  %v167 = vadd.f32 %v66, %v166
  %v168 = vpop.f32.mrf.mxu0
  %v169 = vpop.f32.mrf.mxu0
  %v170 = vadd.f32 %v66, %v169
  %v171 = vpop.f32.mrf.mxu0
  %172 = vmatprep.mubr.bf16.mxu0 0
  %173 = vmatmul.mubr.bf16.gmra.mxu0 %v40
  %v174 = vpop.f32.mrf.mxu0
  %v175 = vadd.f32 %v66, %v174
  %v176 = vpop.f32.mrf.mxu0
  %v177 = vpop.f32.mrf.mxu0
  %v178 = vadd.f32 %v66, %v177
  %v179 = vpop.f32.mrf.mxu0
  %180 = vmatprep.mubr.bf16.mxu0 0
  %181 = vmatmul.mubr.bf16.gmra.mxu0 %v41
  %v182 = vpop.f32.mrf.mxu0
  %v183 = vadd.f32 %v66, %v182
  %v184 = vpop.f32.mrf.mxu0
  %v185 = vpop.f32.mrf.mxu0
  %v186 = vadd.f32 %v66, %v185
  %v187 = vpop.f32.mrf.mxu0
  %188 = vmatprep.mubr.bf16.mxu0 0
  %189 = vmatmul.mubr.bf16.gmra.mxu0 %v42
  %v190 = vpop.f32.mrf.mxu0
  %v191 = vadd.f32 %v66, %v190
  %v192 = vpop.f32.mrf.mxu0
  %v193 = vpop.f32.mrf.mxu0
  %v194 = vadd.f32 %v66, %v193
  %v195 = vpop.f32.mrf.mxu0
  %196 = vmatprep.mubr.bf16.mxu0 0
  %197 = vmatmul.mubr.bf16.gmra.mxu0 %v43
  %v198 = vpop.f32.mrf.mxu0
  %v199 = vadd.f32 %v66, %v198
  %v200 = vpop.f32.mrf.mxu0
  %v201 = vpop.f32.mrf.mxu0
  %v202 = vadd.f32 %v66, %v201
  %v203 = vpop.f32.mrf.mxu0
  %204 = vmatprep.mubr.bf16.mxu0 0
  %205 = vmatmul.mubr.bf16.gmra.mxu0 %v44
  %v206 = vpop.f32.mrf.mxu0
  %v207 = vadd.f32 %v66, %v206
  %v208 = vpop.f32.mrf.mxu0
  %v209 = vpop.f32.mrf.mxu0
  %v210 = vadd.f32 %v66, %v209
  %v211 = vpop.f32.mrf.mxu0
  %212 = vdwg.mxu0
  %v213 = vmax.f32 %v151, 0.0
  %v214 = vmax.f32 %v154, 0.0
  %v215 = vmax.f32 %v159, 0.0
  %v216 = vmax.f32 %v162, 0.0
  %v217 = vmax.f32 %v167, 0.0
  %v218 = vmax.f32 %v170, 0.0
  %v219 = vmax.f32 %v175, 0.0
  %v220 = vmax.f32 %v178, 0.0
  %v221 = vmax.f32 %v183, 0.0
  %v222 = vmax.f32 %v186, 0.0
  %v223 = vmax.f32 %v191, 0.0
  %v224 = vmax.f32 %v194, 0.0
  %v225 = vmax.f32 %v199, 0.0
  %v226 = vmax.f32 %v202, 0.0
  %v227 = vmax.f32 %v207, 0.0
  %v228 = vmax.f32 %v210, 0.0
  %v229 = vpack.c.bf16 %v214, %v213
  %v230 = vpack.c.bf16 %v216, %v215
  %v231 = vpack.c.bf16 %v218, %v217
  %v232 = vpack.c.bf16 %v220, %v219
  %v233 = vpack.c.bf16 %v222, %v221
  %v234 = vpack.c.bf16 %v224, %v223
  %v235 = vpack.c.bf16 %v226, %v225
  %v236 = vpack.c.bf16 %v228, %v227
  %v237 = vld [vmem:[%s3] sm:$0xf]
  %v238 = vld [vmem:[%s3 + $0x4] sm:$0xf]
  %v239 = vld [vmem:[%s3 + $0x8] sm:$0xf]
  %v240 = vld [vmem:[%s3 + $0xc] sm:$0xf]
  %v241 = vld [vmem:[%s3 + $0x10] sm:$0xf]
  %v242 = vld [vmem:[%s3 + $0x14] sm:$0xf]
  %v243 = vld [vmem:[%s3 + $0x18] sm:$0xf]
  %v244 = vld [vmem:[%s3 + $0x1c] sm:$0xf]
  %v245 = vld [vmem:[%s3 + $0x20] sm:$0xf]
  %v246 = vld [vmem:[%s3 + $0x24] sm:$0xf]
  %v247 = vld [vmem:[%s3 + $0x28] sm:$0xf]
  %v248 = vld [vmem:[%s3 + $0x2c] sm:$0xf]
  %v249 = vld [vmem:[%s3 + $0x30] sm:$0xf]
  %v250 = vld [vmem:[%s3 + $0x34] sm:$0xf]
  %v251 = vld [vmem:[%s3 + $0x38] sm:$0xf]
  %v252 = vld [vmem:[%s3 + $0x3c] sm:$0xf]
  %v253 = vld [vmem:[%s4] sm:$0x1]
  %v255 = vlaneseq
  %v256 = vshrl.u32 %v255, 7
  %v257 = vsub.s32 0, %v256
  %v258 = vrot.slane %v253, %v257
  %v276 = vunpack.c.l.b16 %v237
  %v277 = vunpack.c.l.b16 %v238
  %v278 = vunpack.c.l.b16 %v239
  %v279 = vunpack.c.l.b16 %v240
  %v280 = vunpack.c.l.b16 %v241
  %v281 = vunpack.c.l.b16 %v242
  %v282 = vunpack.c.l.b16 %v243
  %v283 = vunpack.c.l.b16 %v244
  %v284 = vunpack.c.l.b16 %v245
  %v285 = vunpack.c.l.b16 %v246
  %v286 = vunpack.c.l.b16 %v247
  %v287 = vunpack.c.l.b16 %v248
  %v288 = vunpack.c.l.b16 %v249
  %v289 = vunpack.c.l.b16 %v250
  %v290 = vunpack.c.l.b16 %v251
  %v291 = vunpack.c.l.b16 %v252
  %v292 = vpack.c.b16 %v277, %v276
  %v293 = vpack.c.b16 %v279, %v278
  %v294 = vpack.c.b16 %v281, %v280
  %v295 = vpack.c.b16 %v283, %v282
  %v296 = vpack.c.b16 %v285, %v284
  %v297 = vpack.c.b16 %v287, %v286
  %v298 = vpack.c.b16 %v289, %v288
  %v299 = vpack.c.b16 %v291, %v290
  %308 = vmatprep.subr.bf16.mxu0 0
  %309 = vmatpush1.bf16.msra.mxu0 %v299
  %310 = vmatprep.subr.bf16.mxu0 0
  %311 = vmatpush1.bf16.msra.mxu0 %v298
  %312 = vmatprep.subr.bf16.mxu0 0
  %313 = vmatpush1.bf16.msra.mxu0 %v297
  %314 = vmatprep.subr.bf16.mxu0 0
  %315 = vmatpush1.bf16.msra.mxu0 %v296
  %316 = vmatprep.subr.bf16.mxu0 0
  %317 = vmatpush1.bf16.msra.mxu0 %v295
  %318 = vmatprep.subr.bf16.mxu0 0
  %319 = vmatpush1.bf16.msra.mxu0 %v294
  %320 = vmatprep.subr.bf16.mxu0 0
  %321 = vmatpush1.bf16.msra.mxu0 %v293
  %322 = vmatprep.subr.bf16.mxu0 0
  %323 = vmatpush1.bf16.msra.mxu0 %v292
  %324 = vmatprep.subr.bf16.mxu0 0
  %325 = vmatpush2.bf16.msra.mxu0 0
  %326 = vmatprep.subr.bf16.mxu0 0
  %327 = vmatpush2.bf16.msra.mxu0 0
  %328 = vmatprep.subr.bf16.mxu0 0
  %329 = vmatpush2.bf16.msra.mxu0 0
  %330 = vmatprep.subr.bf16.mxu0 0
  %331 = vmatpush2.bf16.msra.mxu0 0
  %332 = vmatprep.subr.bf16.mxu0 0
  %333 = vmatpush2.bf16.msra.mxu0 0
  %334 = vmatprep.subr.bf16.mxu0 0
  %335 = vmatpush2.bf16.msra.mxu0 0
  %336 = vmatprep.subr.bf16.mxu0 0
  %337 = vmatpush2.bf16.msra.mxu0 0
  %338 = vmatprep.subr.bf16.mxu0 0
  %339 = vmatpush2.bf16.msra.mxu0 0
  %340 = vmatprep.mubr.bf16.mxu0 0
  %341 = vmatmul.mubr.bf16.gmra.mxu0 %v229
  %v342 = vpop.f32.mrf.mxu0
  %v343 = vadd.f32 %v258, %v342
  %v344 = vpop.f32.mrf.mxu0
  %v345 = vpop.f32.mrf.mxu0
  %v346 = vadd.f32 %v258, %v345
  %v347 = vpop.f32.mrf.mxu0
  %348 = vmatprep.mubr.bf16.mxu0 0
  %349 = vmatmul.mubr.bf16.gmra.mxu0 %v230
  %v350 = vpop.f32.mrf.mxu0
  %v351 = vadd.f32 %v258, %v350
  %v352 = vpop.f32.mrf.mxu0
  %v353 = vpop.f32.mrf.mxu0
  %v354 = vadd.f32 %v258, %v353
  %v355 = vpop.f32.mrf.mxu0
  %356 = vmatprep.mubr.bf16.mxu0 0
  %357 = vmatmul.mubr.bf16.gmra.mxu0 %v231
  %v358 = vpop.f32.mrf.mxu0
  %v359 = vadd.f32 %v258, %v358
  %v360 = vpop.f32.mrf.mxu0
  %v361 = vpop.f32.mrf.mxu0
  %v362 = vadd.f32 %v258, %v361
  %v363 = vpop.f32.mrf.mxu0
  %364 = vmatprep.mubr.bf16.mxu0 0
  %365 = vmatmul.mubr.bf16.gmra.mxu0 %v232
  %v366 = vpop.f32.mrf.mxu0
  %v367 = vadd.f32 %v258, %v366
  %v368 = vpop.f32.mrf.mxu0
  %v369 = vpop.f32.mrf.mxu0
  %v370 = vadd.f32 %v258, %v369
  %v371 = vpop.f32.mrf.mxu0
  %372 = vmatprep.mubr.bf16.mxu0 0
  %373 = vmatmul.mubr.bf16.gmra.mxu0 %v233
  %v374 = vpop.f32.mrf.mxu0
  %v375 = vadd.f32 %v258, %v374
  %v376 = vpop.f32.mrf.mxu0
  %v377 = vpop.f32.mrf.mxu0
  %v378 = vadd.f32 %v258, %v377
  %v379 = vpop.f32.mrf.mxu0
  %380 = vmatprep.mubr.bf16.mxu0 0
  %381 = vmatmul.mubr.bf16.gmra.mxu0 %v234
  %v382 = vpop.f32.mrf.mxu0
  %v383 = vadd.f32 %v258, %v382
  %v384 = vpop.f32.mrf.mxu0
  %v385 = vpop.f32.mrf.mxu0
  %v386 = vadd.f32 %v258, %v385
  %v387 = vpop.f32.mrf.mxu0
  %388 = vmatprep.mubr.bf16.mxu0 0
  %389 = vmatmul.mubr.bf16.gmra.mxu0 %v235
  %v390 = vpop.f32.mrf.mxu0
  %v391 = vadd.f32 %v258, %v390
  %v392 = vpop.f32.mrf.mxu0
  %v393 = vpop.f32.mrf.mxu0
  %v394 = vadd.f32 %v258, %v393
  %v395 = vpop.f32.mrf.mxu0
  %396 = vmatprep.mubr.bf16.mxu0 0
  %397 = vmatmul.mubr.bf16.gmra.mxu0 %v236
  %v398 = vpop.f32.mrf.mxu0
  %v399 = vadd.f32 %v258, %v398
  %v400 = vpop.f32.mrf.mxu0
  %v401 = vpop.f32.mrf.mxu0
  %v402 = vadd.f32 %v258, %v401
  %v403 = vpop.f32.mrf.mxu0
  %404 = vdwg.mxu0
  %405 = vst [vmem:[%s5] sm:$0xff] %v343
  %406 = vst [vmem:[%s5 + $0x8] sm:$0xff] %v346
  %407 = vst [vmem:[%s5 + $0x10] sm:$0xff] %v351
  %408 = vst [vmem:[%s5 + $0x18] sm:$0xff] %v354
  %409 = vst [vmem:[%s5 + $0x20] sm:$0xff] %v359
  %410 = vst [vmem:[%s5 + $0x28] sm:$0xff] %v362
  %411 = vst [vmem:[%s5 + $0x30] sm:$0xff] %v367
  %412 = vst [vmem:[%s5 + $0x38] sm:$0xff] %v370
  %413 = vst [vmem:[%s5 + $0x40] sm:$0xff] %v375
  %414 = vst [vmem:[%s5 + $0x48] sm:$0xff] %v378
  %415 = vst [vmem:[%s5 + $0x50] sm:$0xff] %v383
  %416 = vst [vmem:[%s5 + $0x58] sm:$0xff] %v386
  %417 = vst [vmem:[%s5 + $0x60] sm:$0xff] %v391
  %418 = vst [vmem:[%s5 + $0x68] sm:$0xff] %v394
  %419 = vst [vmem:[%s5 + $0x70] sm:$0xff] %v399
  %420 = vst [vmem:[%s5 + $0x78] sm:$0xff] %v402
  // Predicated region
  $region22: #{feed_forward_block.1} parent=0 // pred_check
    _
  $region23: #{feed_forward_block.1} parent=0 // pred_check_branch
    %422 = sbr.rel (0) target = $region25
  $region24: #{feed_forward_block.1} parent=0 // pred_region
    _
  $region25: #{feed_forward_block.1} parent=0 // pred_fallthru
    _
  // Predicated region
  $region26: #{feed_forward_block.1} parent=0 // pred_check
    _
  $region27: #{feed_forward_block.1} parent=0 // pred_check_branch
    %424 = sbr.rel (0) target = $region29
  $region28: #{feed_forward_block.1} parent=0 // pred_region
    _
  $region29: #{feed_forward_block.1} parent=0 // pred_fallthru
    _

</llo_original>
